<compile_context>
chip_gen: v5e
topology: v5e:2x2
jax: 0.10.0
libtpu: 0.0.40
codegen_flags: <defaults>
</compile_context>

<pallas_src>
import functools

import jax
import jax.numpy as jnp
from jax.experimental import pallas as pl
from jax.experimental.pallas import tpu as pltpu


def _round_up(x: int, m: int) -> int:
    return ((x + m - 1) // m) * m


def _self_attention_kernel(lk_valid,
                           v_ref, k_ref, q_ref,
                           wv_ref, wk_ref, wq_ref, wo_ref, bo_ref,
                           out_ref, attn_ref):
    # Per-step blocks (batch dim squeezed out):
    #   v_ref/k_ref: (Lk_p, D_p)  q_ref: (TQ, D_p)
    #   w*_ref: (D_p, D_p) bf16, pre-transposed so y = x @ W; Wq pre-scaled.
    #   bo_ref: (1, D_p) f32
    cdt = jnp.bfloat16

    # Projections: bf16 MXU inputs, f32 accumulation.
    v = jnp.dot(v_ref[...].astype(cdt), wv_ref[...],
                preferred_element_type=jnp.float32)
    k = jnp.dot(k_ref[...].astype(cdt), wk_ref[...],
                preferred_element_type=jnp.float32)
    q = jnp.dot(q_ref[...].astype(cdt), wq_ref[...],
                preferred_element_type=jnp.float32)   # already * 1/sqrt(D)

    # Scaled scores (TQ, Lk_p): contract last dims directly (no k transpose).
    energy = jax.lax.dot_general(
        q.astype(cdt), k.astype(cdt),
        dimension_numbers=(((1,), (1,)), ((), ())),
        preferred_element_type=jnp.float32)

    # Mask padded key columns (zero-padded keys must not join the softmax).
    if lk_valid < energy.shape[-1]:
        col = jax.lax.broadcasted_iota(jnp.int32, energy.shape, 1)
        energy = jnp.where(col < lk_valid, energy, jnp.finfo(jnp.float32).min)

    # Numerically-stable softmax in f32; divide -> EUP reciprocal + multiply.
    m = jnp.max(energy, axis=-1, keepdims=True)
    e = jnp.exp(energy - m)
    attn = e * pl.reciprocal(jnp.sum(e, axis=-1, keepdims=True), approx=True)

    # Context + output projection (fc_out bias added in f32 after the MXU).
    ctx = jnp.dot(attn.astype(cdt), v.astype(cdt),
                  preferred_element_type=jnp.float32)
    out = jnp.dot(ctx.astype(cdt), wo_ref[...],
                  preferred_element_type=jnp.float32) + bo_ref[...]

    out_ref[...] = out.astype(out_ref.dtype)
    attn_ref[...] = attn.astype(attn_ref.dtype)


def self_attention_forward(values, keys, query, w_v, w_k, w_q, w_o, b_o,
                           *, tq=256):
    """Pallas implementation of SelfAttentionLayer.forward.

    values: (N, Lv, D), keys: (N, Lk, D), query: (N, Lq, D); Lv == Lk.
    w_v/w_k/w_q/w_o: (D, D) PyTorch Linear weights (out_features, in_features).
    b_o: (D,) fc_out bias.
    Returns (out (N, Lq, D), attention (N, Lq, Lk)).
    """
    N, Lv, D = values.shape
    _, Lk, _ = keys.shape
    _, Lq, _ = query.shape
    assert Lv == Lk, "value_len must equal key_len for the attention contraction"

    # Lane/sublane-friendly padded sizes.
    D_p = _round_up(D, 128)
    Lk_p = _round_up(Lk, 128)
    TQ = min(tq, _round_up(Lq, 8))          # query tile (multiple of 8)
    Lq_p = _round_up(Lq, TQ)

    scale = 1.0 / (float(D) ** 0.5)

    # Pre-transpose (PyTorch y = x @ W.T), zero-pad to (D_p, D_p), cast to bf16.
    def pad_w(w):
        return jnp.pad(w, ((0, D_p - D), (0, D_p - D)))

    wv_t = pad_w(w_v.T).astype(jnp.bfloat16)
    wk_t = pad_w(w_k.T).astype(jnp.bfloat16)
    wq_t = pad_w(w_q.T * scale).astype(jnp.bfloat16)   # fold 1/sqrt(D) into Wq
    wo_t = pad_w(w_o.T).astype(jnp.bfloat16)
    bo = jnp.pad(b_o, (0, D_p - D)).reshape(1, D_p).astype(jnp.float32)

    def pad_seq(x, Lp):
        L = x.shape[1]
        return jnp.pad(x, ((0, 0), (0, Lp - L), (0, D_p - D)))

    v_p = pad_seq(values, Lk_p)
    k_p = pad_seq(keys, Lk_p)
    q_p = pad_seq(query, Lq_p)

    kernel = functools.partial(_self_attention_kernel, Lk)

    kv_spec = pl.BlockSpec((None, Lk_p, D_p), lambda n, qi: (n, 0, 0))
    q_spec = pl.BlockSpec((None, TQ, D_p), lambda n, qi: (n, qi, 0))
    # Constant index_map -> never re-DMA'd; single-buffer to reclaim VMEM.
    w_spec = pl.BlockSpec((D_p, D_p), lambda n, qi: (0, 0),
                          pipeline_mode=pl.Buffered(1))
    b_spec = pl.BlockSpec((1, D_p), lambda n, qi: (0, 0),
                          pipeline_mode=pl.Buffered(1))

    out_p, attn_p = pl.pallas_call(
        kernel,
        out_shape=(
            jax.ShapeDtypeStruct((N, Lq_p, D_p), query.dtype),
            jax.ShapeDtypeStruct((N, Lq_p, Lk_p), query.dtype),
        ),
        grid_spec=pltpu.PrefetchScalarGridSpec(
            num_scalar_prefetch=0,
            grid=(N, Lq_p // TQ),
            in_specs=[
                kv_spec,   # values
                kv_spec,   # keys
                q_spec,    # query tile
                w_spec,    # Wv^T
                w_spec,    # Wk^T
                w_spec,    # Wq^T (pre-scaled)
                w_spec,    # Wo^T
                b_spec,    # bo
            ],
            out_specs=(
                pl.BlockSpec((None, TQ, D_p), lambda n, qi: (n, qi, 0)),
                pl.BlockSpec((None, TQ, Lk_p), lambda n, qi: (n, qi, 0)),
            ),
        ),
        compiler_params=pltpu.CompilerParams(
            dimension_semantics=("parallel", "parallel"),
            vmem_limit_bytes=64 * 1024 * 1024,
        ),
    )(v_p, k_p, q_p, wv_t, wk_t, wq_t, wo_t, bo)

    # Strip the lane/tile padding.
    return out_p[:, :Lq, :D], attn_p[:, :Lq, :Lk]


def _reference(values, keys, query, w_v, w_k, w_q, w_o, b_o):
    """Pure-JAX mirror of the PyTorch forward, for correctness checking."""
    D = query.shape[-1]
    hi = jax.lax.Precision.HIGHEST
    v = jnp.einsum('nld,ed->nle', values, w_v, precision=hi)
    k = jnp.einsum('nld,ed->nle', keys, w_k, precision=hi)
    q = jnp.einsum('nld,ed->nle', query, w_q, precision=hi)
    energy = jnp.einsum('nqd,nkd->nqk', q, k, precision=hi)
    attention = jax.nn.softmax(energy / (D ** 0.5), axis=2)
    out = jnp.einsum('nql,nld->nqd', attention, v, precision=hi)
    out = jnp.einsum('nqd,ed->nqe', out, w_o, precision=hi) + b_o
    return out, attention


if __name__ == "__main__":
    def run_case(N, Lq, Lk, D, tq, key):
        kv, kk, kq, kwv, kwk, kwq, kwo, kbo = jax.random.split(key, 8)
        values = jax.random.normal(kv, (N, Lk, D), dtype=jnp.float32)
        keys_in = jax.random.normal(kk, (N, Lk, D), dtype=jnp.float32)
        query = jax.random.normal(kq, (N, Lq, D), dtype=jnp.float32)

        # PyTorch-layout Linear weights (out_features, in_features).
        w_v = 0.2 * jax.random.normal(kwv, (D, D), dtype=jnp.float32)
        w_k = 0.2 * jax.random.normal(kwk, (D, D), dtype=jnp.float32)
        w_q = 0.2 * jax.random.normal(kwq, (D, D), dtype=jnp.float32)
        w_o = 0.2 * jax.random.normal(kwo, (D, D), dtype=jnp.float32)
        b_o = 0.1 * jax.random.normal(kbo, (D,), dtype=jnp.float32)

        out, attn = self_attention_forward(values, keys_in, query,
                                           w_v, w_k, w_q, w_o, b_o, tq=tq)
        out = jax.block_until_ready(out)
        attn = jax.block_until_ready(attn)

        ref_out, ref_attn = _reference(values, keys_in, query,
                                       w_v, w_k, w_q, w_o, b_o)

        assert out.shape == (N, Lq, D), out.shape
        assert attn.shape == (N, Lq, Lk), attn.shape
        assert out.dtype == query.dtype and attn.dtype == query.dtype
        # bf16 MXU inputs (f32 accumulation) -> loose but meaningful tolerance
        # vs. a Precision.HIGHEST f32 reference.
        assert jnp.allclose(attn, ref_attn, rtol=2e-2, atol=1e-2), "attention mismatch"
        assert jnp.allclose(out, ref_out, rtol=2e-2, atol=2e-2), "output mismatch"
        # Softmax rows sum to ~1 (approx EUP reciprocal).
        assert jnp.allclose(jnp.sum(attn, axis=-1), 1.0, rtol=5e-3, atol=5e-3)

    master = jax.random.PRNGKey(0)
    k0, k1 = jax.random.split(master)
    # Small shapes consistent with the module: batch=2, seq=8, embed_size=32.
    run_case(N=2, Lq=8, Lk=8, D=32, tq=256, key=k0)
    # Exercise query tiling + key-padding mask (Lq not a multiple of TQ, Lk < 128).
    run_case(N=2, Lq=40, Lk=40, D=32, tq=16, key=k1)

    print("KERNEL_OK")
</pallas_src>

<mosaic_0001>
module attributes {stable_mosaic.version = 11 : i64} {
  func.func @_self_attention_kernel(%arg0: i32, %arg1: i32, %arg2: memref<1x128x128xf32, #tpu.memory_space<vmem>>, %arg3: memref<1x128x128xf32, #tpu.memory_space<vmem>>, %arg4: memref<1x8x128xf32, #tpu.memory_space<vmem>>, %arg5: memref<128x128xbf16, #tpu.memory_space<vmem>>, %arg6: memref<128x128xbf16, #tpu.memory_space<vmem>>, %arg7: memref<128x128xbf16, #tpu.memory_space<vmem>>, %arg8: memref<128x128xbf16, #tpu.memory_space<vmem>>, %arg9: memref<1x128xf32, #tpu.memory_space<vmem>>, %arg10: memref<1x8x128xf32, #tpu.memory_space<vmem>>, %arg11: memref<1x8x128xf32, #tpu.memory_space<vmem>>) attributes {dimension_semantics = [#tpu.dimension_semantics<parallel>, #tpu.dimension_semantics<parallel>], iteration_bounds = array<i64: 2, 1>, scalar_prefetch = 0 : i64, scratch_operands = 0 : i64, tpu.core_type = #tpu.core_type<tc>, window_params = [{transform_indices = @transform_0, window_bounds = array<i64: 1, 128, 128>}, {transform_indices = @transform_1, window_bounds = array<i64: 1, 128, 128>}, {transform_indices = @transform_2, window_bounds = array<i64: 1, 8, 128>}, {pipeline_mode = #tpu.pipeline_mode<synchronous>, transform_indices = @transform_3, window_bounds = array<i64: 128, 128>}, {pipeline_mode = #tpu.pipeline_mode<synchronous>, transform_indices = @transform_4, window_bounds = array<i64: 128, 128>}, {pipeline_mode = #tpu.pipeline_mode<synchronous>, transform_indices = @transform_5, window_bounds = array<i64: 128, 128>}, {pipeline_mode = #tpu.pipeline_mode<synchronous>, transform_indices = @transform_6, window_bounds = array<i64: 128, 128>}, {pipeline_mode = #tpu.pipeline_mode<synchronous>, transform_indices = @transform_7, window_bounds = array<i64: 1, 128>}, {transform_indices = @transform_8, window_bounds = array<i64: 1, 8, 128>}, {transform_indices = @transform_9, window_bounds = array<i64: 1, 8, 128>}]} {
    %c0 = arith.constant 0 : index
    %c0_0 = arith.constant 0 : index
    %c0_1 = arith.constant 0 : index
    %0 = vector.load %arg2[%c0, %c0_0, %c0_1] : memref<1x128x128xf32, #tpu.memory_space<vmem>>, vector<1x128x128xf32>
    %1 = vector.shape_cast %0 : vector<1x128x128xf32> to vector<128x128xf32>
    %2 = arith.truncf %1 : vector<128x128xf32> to vector<128x128xbf16>
    %c0_2 = arith.constant 0 : index
    %c0_3 = arith.constant 0 : index
    %3 = vector.load %arg5[%c0_2, %c0_3] : memref<128x128xbf16, #tpu.memory_space<vmem>>, vector<128x128xbf16>
    %cst = arith.constant dense<0.000000e+00> : vector<128x128xf32>
    %4 = tpu.matmul %2, %3, %cst {dimension_numbers = #tpu.dot_dimension_numbers<[1], [0], [0], [1], [0, 0, 1, 1], [], []>} : vector<128x128xbf16>, vector<128x128xbf16>, vector<128x128xf32> -> vector<128x128xf32>
    %c0_4 = arith.constant 0 : index
    %c0_5 = arith.constant 0 : index
    %c0_6 = arith.constant 0 : index
    %5 = vector.load %arg3[%c0_4, %c0_5, %c0_6] : memref<1x128x128xf32, #tpu.memory_space<vmem>>, vector<1x128x128xf32>
    %6 = vector.shape_cast %5 : vector<1x128x128xf32> to vector<128x128xf32>
    %7 = arith.truncf %6 : vector<128x128xf32> to vector<128x128xbf16>
    %c0_7 = arith.constant 0 : index
    %c0_8 = arith.constant 0 : index
    %8 = vector.load %arg6[%c0_7, %c0_8] : memref<128x128xbf16, #tpu.memory_space<vmem>>, vector<128x128xbf16>
    %cst_9 = arith.constant dense<0.000000e+00> : vector<128x128xf32>
    %9 = tpu.matmul %7, %8, %cst_9 {dimension_numbers = #tpu.dot_dimension_numbers<[1], [0], [0], [1], [0, 0, 1, 1], [], []>} : vector<128x128xbf16>, vector<128x128xbf16>, vector<128x128xf32> -> vector<128x128xf32>
    %c0_10 = arith.constant 0 : index
    %c0_11 = arith.constant 0 : index
    %c0_12 = arith.constant 0 : index
    %10 = vector.load %arg4[%c0_10, %c0_11, %c0_12] : memref<1x8x128xf32, #tpu.memory_space<vmem>>, vector<1x8x128xf32>
    %11 = vector.shape_cast %10 : vector<1x8x128xf32> to vector<8x128xf32>
    %12 = arith.truncf %11 : vector<8x128xf32> to vector<8x128xbf16>
    %c0_13 = arith.constant 0 : index
    %c0_14 = arith.constant 0 : index
    %13 = vector.load %arg7[%c0_13, %c0_14] : memref<128x128xbf16, #tpu.memory_space<vmem>>, vector<128x128xbf16>
    %cst_15 = arith.constant dense<0.000000e+00> : vector<8x128xf32>
    %14 = tpu.matmul %12, %13, %cst_15 {dimension_numbers = #tpu.dot_dimension_numbers<[1], [0], [0], [1], [0, 0, 1, 1], [], []>} : vector<8x128xbf16>, vector<128x128xbf16>, vector<8x128xf32> -> vector<8x128xf32>
    %15 = arith.truncf %14 : vector<8x128xf32> to vector<8x128xbf16>
    %16 = arith.truncf %9 : vector<128x128xf32> to vector<128x128xbf16>
    %cst_16 = arith.constant dense<0.000000e+00> : vector<8x128xf32>
    %17 = tpu.matmul %15, %16, %cst_16 {dimension_numbers = #tpu.dot_dimension_numbers<[1], [1], [0], [0], [0, 0, 1, 0], [], []>} : vector<8x128xbf16>, vector<128x128xbf16>, vector<8x128xf32> -> vector<8x128xf32>
    %18 = tpu.iota {dimensions = array<i32: 1>} : vector<8x128xi32>
    %c8_i32 = arith.constant 8 : i32
    %19 = vector.broadcast %c8_i32 : i32 to vector<8x128xi32>
    %20 = arith.cmpi slt, %18, %19 : vector<8x128xi32>
    %cst_17 = arith.constant -3.40282347E+38 : f32
    %21 = vector.broadcast %cst_17 : f32 to vector<8x128xf32>
    %22 = arith.select %20, %17, %21 : vector<8x128xi1>, vector<8x128xf32>
    %cst_18 = arith.constant dense<0xFF800000> : vector<8xf32>
    %23 = vector.multi_reduction <maximumf>, %22, %cst_18 [1] : vector<8x128xf32> to vector<8xf32>
    %24 = vector.shape_cast %23 : vector<8xf32> to vector<8x1xf32>
    %25 = vector.broadcast %24 : vector<8x1xf32> to vector<8x128xf32>
    %26 = arith.subf %22, %25 : vector<8x128xf32>
    %27 = math.exp %26 : vector<8x128xf32>
    %cst_19 = arith.constant dense<0.000000e+00> : vector<8xf32>
    %28 = vector.multi_reduction <add>, %27, %cst_19 [1] : vector<8x128xf32> to vector<8xf32>
    %29 = vector.shape_cast %28 : vector<8xf32> to vector<8x1xf32>
    %30 = tpu.reciprocal %29 {approx = true} : vector<8x1xf32> -> vector<8x1xf32>
    %31 = vector.broadcast %30 : vector<8x1xf32> to vector<8x128xf32>
    %32 = arith.mulf %27, %31 : vector<8x128xf32>
    %33 = arith.truncf %32 : vector<8x128xf32> to vector<8x128xbf16>
    %34 = arith.truncf %4 : vector<128x128xf32> to vector<128x128xbf16>
    %cst_20 = arith.constant dense<0.000000e+00> : vector<8x128xf32>
    %35 = tpu.matmul %33, %34, %cst_20 {dimension_numbers = #tpu.dot_dimension_numbers<[1], [0], [0], [1], [0, 0, 1, 1], [], []>} : vector<8x128xbf16>, vector<128x128xbf16>, vector<8x128xf32> -> vector<8x128xf32>
    %36 = arith.truncf %35 : vector<8x128xf32> to vector<8x128xbf16>
    %c0_21 = arith.constant 0 : index
    %c0_22 = arith.constant 0 : index
    %37 = vector.load %arg8[%c0_21, %c0_22] : memref<128x128xbf16, #tpu.memory_space<vmem>>, vector<128x128xbf16>
    %cst_23 = arith.constant dense<0.000000e+00> : vector<8x128xf32>
    %38 = tpu.matmul %36, %37, %cst_23 {dimension_numbers = #tpu.dot_dimension_numbers<[1], [0], [0], [1], [0, 0, 1, 1], [], []>} : vector<8x128xbf16>, vector<128x128xbf16>, vector<8x128xf32> -> vector<8x128xf32>
    %c0_24 = arith.constant 0 : index
    %c0_25 = arith.constant 0 : index
    %39 = vector.load %arg9[%c0_24, %c0_25] : memref<1x128xf32, #tpu.memory_space<vmem>>, vector<1x128xf32>
    %40 = vector.broadcast %39 : vector<1x128xf32> to vector<8x128xf32>
    %41 = arith.addf %38, %40 : vector<8x128xf32>
    %c0_26 = arith.constant 0 : index
    %c0_27 = arith.constant 0 : index
    %c0_28 = arith.constant 0 : index
    %42 = vector.load %arg10[%c0_26, %c0_27, %c0_28] : memref<1x8x128xf32, #tpu.memory_space<vmem>>, vector<1x8x128xf32>
    %43 = vector.shape_cast %42 : vector<1x8x128xf32> to vector<8x128xf32>
    %44 = vector.shape_cast %41 : vector<8x128xf32> to vector<1x8x128xf32>
    tpu.vector_store %arg10[%c0_26, %c0_27, %c0_28], %44 {strides = array<i32>} : memref<1x8x128xf32, #tpu.memory_space<vmem>>, vector<1x8x128xf32>,
    %c0_29 = arith.constant 0 : index
    %c0_30 = arith.constant 0 : index
    %c0_31 = arith.constant 0 : index
    %45 = vector.load %arg11[%c0_29, %c0_30, %c0_31] : memref<1x8x128xf32, #tpu.memory_space<vmem>>, vector<1x8x128xf32>
    %46 = vector.shape_cast %45 : vector<1x8x128xf32> to vector<8x128xf32>
    %47 = vector.shape_cast %32 : vector<8x128xf32> to vector<1x8x128xf32>
    tpu.vector_store %arg11[%c0_29, %c0_30, %c0_31], %47 {strides = array<i32>} : memref<1x8x128xf32, #tpu.memory_space<vmem>>, vector<1x8x128xf32>,
    return
  }
  func.func @transform_0(%arg0: i32, %arg1: i32) -> (i32, i32, i32) {
    %c0_i32 = arith.constant 0 : i32
    %c0_i32_0 = arith.constant 0 : i32
    %c0_i32_1 = arith.constant 0 : i32
    return %arg0, %c0_i32, %c0_i32_0 : i32, i32, i32
  }
  func.func @transform_1(%arg0: i32, %arg1: i32) -> (i32, i32, i32) {
    %c0_i32 = arith.constant 0 : i32
    %c0_i32_0 = arith.constant 0 : i32
    %c0_i32_1 = arith.constant 0 : i32
    return %arg0, %c0_i32, %c0_i32_0 : i32, i32, i32
  }
  func.func @transform_2(%arg0: i32, %arg1: i32) -> (i32, i32, i32) {
    %c0_i32 = arith.constant 0 : i32
    %c0_i32_0 = arith.constant 0 : i32
    return %arg0, %arg1, %c0_i32 : i32, i32, i32
  }
  func.func @transform_3(%arg0: i32, %arg1: i32) -> (i32, i32) {
    %c0_i32 = arith.constant 0 : i32
    %c0_i32_0 = arith.constant 0 : i32
    %c0_i32_1 = arith.constant 0 : i32
    return %c0_i32, %c0_i32_0 : i32, i32
  }
  func.func @transform_4(%arg0: i32, %arg1: i32) -> (i32, i32) {
    %c0_i32 = arith.constant 0 : i32
    %c0_i32_0 = arith.constant 0 : i32
    %c0_i32_1 = arith.constant 0 : i32
    return %c0_i32, %c0_i32_0 : i32, i32
  }
  func.func @transform_5(%arg0: i32, %arg1: i32) -> (i32, i32) {
    %c0_i32 = arith.constant 0 : i32
    %c0_i32_0 = arith.constant 0 : i32
    %c0_i32_1 = arith.constant 0 : i32
    return %c0_i32, %c0_i32_0 : i32, i32
  }
  func.func @transform_6(%arg0: i32, %arg1: i32) -> (i32, i32) {
    %c0_i32 = arith.constant 0 : i32
    %c0_i32_0 = arith.constant 0 : i32
    %c0_i32_1 = arith.constant 0 : i32
    return %c0_i32, %c0_i32_0 : i32, i32
  }
  func.func @transform_7(%arg0: i32, %arg1: i32) -> (i32, i32) {
    %c0_i32 = arith.constant 0 : i32
    %c0_i32_0 = arith.constant 0 : i32
    %c0_i32_1 = arith.constant 0 : i32
    return %c0_i32, %c0_i32_0 : i32, i32
  }
  func.func @transform_8(%arg0: i32, %arg1: i32) -> (i32, i32, i32) {
    %c0_i32 = arith.constant 0 : i32
    %c0_i32_0 = arith.constant 0 : i32
    return %arg0, %arg1, %c0_i32 : i32, i32, i32
  }
  func.func @transform_9(%arg0: i32, %arg1: i32) -> (i32, i32, i32) {
    %c0_i32 = arith.constant 0 : i32
    %c0_i32_0 = arith.constant 0 : i32
    return %arg0, %arg1, %c0_i32 : i32, i32, i32
  }
}

</mosaic_0001>

<llo_original>
// kernel: tpu_custom_call.1
$region0: #{tpu_custom_call.1}
  #allocation0 [shape = 'u32[]', space=smem, size = 0x4, offset = 0x4, fixed_abs, tag = 'smem constant byte address 0x4 - core index']
  #allocation1 [shape = 'u32[72,128]{1,0:T(1,128)}', space=vmem, size = 0x9000, scoped, tag = 'internal scratch']
  %s0 = inlined_call_operand.hbm [shape: f32[2,128,128], index: 0, kind: input, shape index: {}]
  %s1 = inlined_call_operand.hbm [shape: f32[2,128,128], index: 1, kind: input, shape index: {}]
  %s2 = inlined_call_operand.hbm [shape: f32[2,8,128], index: 2, kind: input, shape index: {}]
  %s3 = inlined_call_operand.hbm [shape: bf16[128,128], index: 3, kind: input, shape index: {}]
  %s4 = inlined_call_operand.hbm [shape: bf16[128,128], index: 4, kind: input, shape index: {}]
  %s5 = inlined_call_operand.hbm [shape: bf16[128,128], index: 5, kind: input, shape index: {}]
  %s6 = inlined_call_operand.hbm [shape: bf16[128,128], index: 6, kind: input, shape index: {}]
  %s7 = inlined_call_operand.vmem [shape: f32[1,128], index: 7, kind: input, shape index: {}]
  %s8 = inlined_call_operand.hbm [shape: f32[2,8,128], index: 8, kind: output, shape index: {0}]
  %s9 = inlined_call_operand.hbm [shape: f32[2,8,128], index: 9, kind: output, shape index: {1}]
  %10 = xla_tuple %s8, %s9
  %s11 = sld [smem:[#allocation0]]
  $region101: #{tpu_custom_call.1} parent=0
    _
  %s13 = ssub.s32 1, %s11
  %s14 = scalar_select 0, %s13, %s11
  $region1: #{tpu_custom_call.1} parent=0
    #allocation2 [shape = 'u8[131072]{0}', space=vmem, size = 0x20000, scoped, tag = 'input window, operand 0']
    #allocation3 [shape = 's32[2]{0}', space=sflag, size = 0x8, scoped, tag = 'scoped memory for tpu_custom_call.1']
    #allocation4 [shape = 's32[2]{0}', space=sflag, size = 0x8, scoped, tag = 'scoped memory for tpu_custom_call.1']
    #allocation5 [shape = 'u8[131072]{0}', space=vmem, size = 0x20000, scoped, tag = 'input window, operand 1']
    #allocation6 [shape = 's32[2]{0}', space=sflag, size = 0x8, scoped, tag = 'scoped memory for tpu_custom_call.1']
    #allocation7 [shape = 'u8[8192]{0}', space=vmem, size = 0x2000, scoped, tag = 'input window, operand 2']
    #allocation8 [shape = 'u8[32768]{0}', space=vmem, size = 0x8000, scoped, tag = 'input window, operand 3, single buffered']
    #allocation9 [shape = 's32[1]{0}', space=sflag, size = 0x4, scoped, tag = 'scoped memory for tpu_custom_call.1']
    #allocation10 [shape = 'u8[32768]{0}', space=vmem, size = 0x8000, scoped, tag = 'input window, operand 4, single buffered']
    #allocation11 [shape = 'u8[32768]{0}', space=vmem, size = 0x8000, scoped, tag = 'input window, operand 5, single buffered']
    #allocation12 [shape = 's32[1]{0}', space=sflag, size = 0x4, scoped, tag = 'scoped memory for tpu_custom_call.1']
    #allocation13 [shape = 'u8[32768]{0}', space=vmem, size = 0x8000, scoped, tag = 'input window, operand 6, single buffered']
    #allocation14 [shape = 'u8[8192]{0}', space=vmem, size = 0x2000, scoped, tag = 'output window, operand 0']
    #allocation15 [shape = 'u8[8192]{0}', space=vmem, size = 0x2000, scoped, tag = 'output window, operand 1']
    #allocation16 [shape = 's32[2]{0}', space=sflag, size = 0x8, scoped, tag = 'scoped memory for tpu_custom_call.1']
    %15 = vsyncpa [#allocation3], 0
    %s16 = scalar_lea.sflag [#allocation3], 1
    %17 = vsyncpa %s16, 0
    %18 = vsyncpa [#allocation6], 0
    %s19 = scalar_lea.sflag [#allocation6], 1
    %20 = vsyncpa %s19, 0
    %21 = vsyncpa [#allocation9], 0
    %22 = vsyncpa [#allocation12], 0
    %23 = vsyncpa [#allocation4], 0
    %s24 = scalar_lea.sflag [#allocation4], 1
    %25 = vsyncpa %s24, 0
    %26 = vsyncpa [#allocation16], 0
    %s27 = scalar_lea.sflag [#allocation16], 1
    %28 = vsyncpa %s27, 0
    loop: start=0, step=1, limit=4
    $region2: #{tpu_custom_call.1} parent=1 // loop_pre_header
      _
    $region3: #{tpu_custom_call.1} parent=1 // loop_header
      %s30 = sphi 0, %s34
      %p31 = scmp.ge.s32.totalorder %s30, 4
      %s37 = sphi 0, %s49
      %s38 = sphi 0, %s45
      %s39 = sphi 0, %s37
      %s40 = sphi 0, %s38
      %s41 = sphi 0, %s39
      %s42 = sphi 0, %s40
      %s52 = sphi 0, %s54
      %s55 = sphi 0, %s52
      %s56 = sphi 0, %s55
      %s72 = sphi 0, %s56
      %s78 = sphi 0, %s80
      %s81 = sphi 0, %s78
      %s82 = sphi 0, %s81
      %s98 = sphi 0, %s82
      %s106 = sphi 0, %s108
      %s109 = sphi 0, %s106
      %s110 = sphi 0, %s109
      %s126 = sphi 0, %s110
      %s130 = sphi 0, %s130
      %s132 = sphi 0, %s130
      %s133 = sphi 0, %s132
      %s147 = sphi 0, %s133
      %s151 = sphi 0, %s151
      %s153 = sphi 0, %s151
      %s154 = sphi 0, %s153
      %s168 = sphi 0, %s154
      %s172 = sphi 0, %s172
      %s174 = sphi 0, %s172
      %s175 = sphi 0, %s174
      %s189 = sphi 0, %s175
      %s193 = sphi 0, %s193
      %s195 = sphi 0, %s193
      %s196 = sphi 0, %s195
      %s210 = sphi 0, %s196
      %s214 = sphi 0, %s214
      %s216 = sphi 0, %s214
      %s217 = sphi 0, %s216
      %s231 = sphi 0, %s217
      %s239 = sphi 0, %s241
      %s242 = sphi 0, %s239
      %s243 = sphi 0, %s242
      %s259 = sphi 0, %s243
      %s267 = sphi 0, %s269
      %s270 = sphi 0, %s267
      %s271 = sphi 0, %s270
      %s287 = sphi 0, %s271
    $region4: #{tpu_custom_call.1} parent=1 // loop_header_branch
      %33 = sbr.rel (%p31) target = $region8
    $region5: #{tpu_custom_call.1} parent=1 // loop_body
      %s35 = ssub.s32 %s30, 1
      %s36 = ssub.s32 %s30, 2
      %s43 = sadd.s32 1, %s38
      %p44 = scmp.ge.s32.totalorder %s43, 1
      %s45 = scalar_select %p44, 0, %s43
      %s46 = sadd.s32 1, %s37
      %s47 = scalar_select %p44, %s46, %s37
      %p48 = scmp.ge.s32.totalorder %s47, 2
      %s49 = scalar_select %p48, 0, %s47
      %s50 = ssub.s32 %s37, %s49
      %p51 = scmp.eq.s32.totalorder %s50, 0
      %s53 = sadd.s32 %s52, 1
      %s54 = scalar_select %p51, %s52, %s53
      %p57 = pneg %p51
      %p58 = scmp.eq.s32.totalorder %s30, 1
      %p59 = por %p57, %p58
      %p60 = scmp.ne.s32.totalorder %s52, %s55
      %p61 = scmp.eq.s32.totalorder %s30, 0
      %p62 = por %p60, %p61
      %p63 = scmp.ne.s32.totalorder %s52, %s55
      %p64 = scmp.eq.s32.totalorder %s35, 1
      %p65 = por %p63, %p64
      %p66 = scmp.ne.s32.totalorder %s55, %s56
      %p67 = scmp.eq.s32.totalorder %s35, 0
      %p68 = por %p66, %p67
      %p69 = scmp.ne.s32.totalorder %s55, %s56
      %p70 = scmp.eq.s32.totalorder %s36, 1
      %p71 = por %p69, %p70
      %p73 = scmp.ne.s32.totalorder %s56, %s72
      %p74 = scmp.eq.s32.totalorder %s36, 0
      %p75 = por %p73, %p74
      %s76 = ssub.s32 %s37, %s49
      %p77 = scmp.eq.s32.totalorder %s76, 0
      %s79 = sadd.s32 %s78, 1
      %s80 = scalar_select %p77, %s78, %s79
      %p83 = pneg %p77
      %p84 = scmp.eq.s32.totalorder %s30, 1
      %p85 = por %p83, %p84
      %p86 = scmp.ne.s32.totalorder %s78, %s81
      %p87 = scmp.eq.s32.totalorder %s30, 0
      %p88 = por %p86, %p87
      %p89 = scmp.ne.s32.totalorder %s78, %s81
      %p90 = scmp.eq.s32.totalorder %s35, 1
      %p91 = por %p89, %p90
      %p92 = scmp.ne.s32.totalorder %s81, %s82
      %p93 = scmp.eq.s32.totalorder %s35, 0
      %p94 = por %p92, %p93
      %p95 = scmp.ne.s32.totalorder %s81, %s82
      %p96 = scmp.eq.s32.totalorder %s36, 1
      %p97 = por %p95, %p96
      %p99 = scmp.ne.s32.totalorder %s82, %s98
      %p100 = scmp.eq.s32.totalorder %s36, 0
      %p101 = por %p99, %p100
      %s102 = ssub.s32 %s37, %s49
      %s103 = ssub.s32 %s38, %s45
      %s104 = sor.u32 %s102, %s103
      %p105 = scmp.eq.s32.totalorder %s104, 0
      %s107 = sadd.s32 %s106, 1
      %s108 = scalar_select %p105, %s106, %s107
      %p111 = pneg %p105
      %p112 = scmp.eq.s32.totalorder %s30, 1
      %p113 = por %p111, %p112
      %p114 = scmp.ne.s32.totalorder %s106, %s109
      %p115 = scmp.eq.s32.totalorder %s30, 0
      %p116 = por %p114, %p115
      %p117 = scmp.ne.s32.totalorder %s106, %s109
      %p118 = scmp.eq.s32.totalorder %s35, 1
      %p119 = por %p117, %p118
      %p120 = scmp.ne.s32.totalorder %s109, %s110
      %p121 = scmp.eq.s32.totalorder %s35, 0
      %p122 = por %p120, %p121
      %p123 = scmp.ne.s32.totalorder %s109, %s110
      %p124 = scmp.eq.s32.totalorder %s36, 1
      %p125 = por %p123, %p124
      %p127 = scmp.ne.s32.totalorder %s110, %s126
      %p128 = scmp.eq.s32.totalorder %s36, 0
      %p129 = por %p127, %p128
      %s131 = sadd.s32 %s130, 1
      %p134 = scmp.eq.s32.totalorder %s30, 1
      %p135 = scmp.ne.s32.totalorder %s130, %s132
      %p136 = scmp.eq.s32.totalorder %s30, 0
      %p137 = por %p135, %p136
      %p138 = scmp.ne.s32.totalorder %s130, %s132
      %p139 = scmp.eq.s32.totalorder %s35, 1
      %p140 = por %p138, %p139
      %p141 = scmp.ne.s32.totalorder %s132, %s133
      %p142 = scmp.eq.s32.totalorder %s35, 0
      %p143 = por %p141, %p142
      %p144 = scmp.ne.s32.totalorder %s132, %s133
      %p145 = scmp.eq.s32.totalorder %s36, 1
      %p146 = por %p144, %p145
      %p148 = scmp.ne.s32.totalorder %s133, %s147
      %p149 = scmp.eq.s32.totalorder %s36, 0
      %p150 = por %p148, %p149
      %s152 = sadd.s32 %s151, 1
      %p155 = scmp.eq.s32.totalorder %s30, 1
      %p156 = scmp.ne.s32.totalorder %s151, %s153
      %p157 = scmp.eq.s32.totalorder %s30, 0
      %p158 = por %p156, %p157
      %p159 = scmp.ne.s32.totalorder %s151, %s153
      %p160 = scmp.eq.s32.totalorder %s35, 1
      %p161 = por %p159, %p160
      %p162 = scmp.ne.s32.totalorder %s153, %s154
      %p163 = scmp.eq.s32.totalorder %s35, 0
      %p164 = por %p162, %p163
      %p165 = scmp.ne.s32.totalorder %s153, %s154
      %p166 = scmp.eq.s32.totalorder %s36, 1
      %p167 = por %p165, %p166
      %p169 = scmp.ne.s32.totalorder %s154, %s168
      %p170 = scmp.eq.s32.totalorder %s36, 0
      %p171 = por %p169, %p170
      %s173 = sadd.s32 %s172, 1
      %p176 = scmp.eq.s32.totalorder %s30, 1
      %p177 = scmp.ne.s32.totalorder %s172, %s174
      %p178 = scmp.eq.s32.totalorder %s30, 0
      %p179 = por %p177, %p178
      %p180 = scmp.ne.s32.totalorder %s172, %s174
      %p181 = scmp.eq.s32.totalorder %s35, 1
      %p182 = por %p180, %p181
      %p183 = scmp.ne.s32.totalorder %s174, %s175
      %p184 = scmp.eq.s32.totalorder %s35, 0
      %p185 = por %p183, %p184
      %p186 = scmp.ne.s32.totalorder %s174, %s175
      %p187 = scmp.eq.s32.totalorder %s36, 1
      %p188 = por %p186, %p187
      %p190 = scmp.ne.s32.totalorder %s175, %s189
      %p191 = scmp.eq.s32.totalorder %s36, 0
      %p192 = por %p190, %p191
      %s194 = sadd.s32 %s193, 1
      %p197 = scmp.eq.s32.totalorder %s30, 1
      %p198 = scmp.ne.s32.totalorder %s193, %s195
      %p199 = scmp.eq.s32.totalorder %s30, 0
      %p200 = por %p198, %p199
      %p201 = scmp.ne.s32.totalorder %s193, %s195
      %p202 = scmp.eq.s32.totalorder %s35, 1
      %p203 = por %p201, %p202
      %p204 = scmp.ne.s32.totalorder %s195, %s196
      %p205 = scmp.eq.s32.totalorder %s35, 0
      %p206 = por %p204, %p205
      %p207 = scmp.ne.s32.totalorder %s195, %s196
      %p208 = scmp.eq.s32.totalorder %s36, 1
      %p209 = por %p207, %p208
      %p211 = scmp.ne.s32.totalorder %s196, %s210
      %p212 = scmp.eq.s32.totalorder %s36, 0
      %p213 = por %p211, %p212
      %s215 = sadd.s32 %s214, 1
      %p218 = scmp.eq.s32.totalorder %s30, 1
      %p219 = scmp.ne.s32.totalorder %s214, %s216
      %p220 = scmp.eq.s32.totalorder %s30, 0
      %p221 = por %p219, %p220
      %p222 = scmp.ne.s32.totalorder %s214, %s216
      %p223 = scmp.eq.s32.totalorder %s35, 1
      %p224 = por %p222, %p223
      %p225 = scmp.ne.s32.totalorder %s216, %s217
      %p226 = scmp.eq.s32.totalorder %s35, 0
      %p227 = por %p225, %p226
      %p228 = scmp.ne.s32.totalorder %s216, %s217
      %p229 = scmp.eq.s32.totalorder %s36, 1
      %p230 = por %p228, %p229
      %p232 = scmp.ne.s32.totalorder %s217, %s231
      %p233 = scmp.eq.s32.totalorder %s36, 0
      %p234 = por %p232, %p233
      %s235 = ssub.s32 %s37, %s49
      %s236 = ssub.s32 %s38, %s45
      %s237 = sor.u32 %s235, %s236
      %p238 = scmp.eq.s32.totalorder %s237, 0
      %s240 = sadd.s32 %s239, 1
      %s241 = scalar_select %p238, %s239, %s240
      %p244 = pneg %p238
      %p245 = scmp.eq.s32.totalorder %s30, 1
      %p246 = por %p244, %p245
      %p247 = scmp.ne.s32.totalorder %s239, %s242
      %p248 = scmp.eq.s32.totalorder %s30, 0
      %p249 = por %p247, %p248
      %p250 = scmp.ne.s32.totalorder %s239, %s242
      %p251 = scmp.eq.s32.totalorder %s35, 1
      %p252 = por %p250, %p251
      %p253 = scmp.ne.s32.totalorder %s242, %s243
      %p254 = scmp.eq.s32.totalorder %s35, 0
      %p255 = por %p253, %p254
      %p256 = scmp.ne.s32.totalorder %s242, %s243
      %p257 = scmp.eq.s32.totalorder %s36, 1
      %p258 = por %p256, %p257
      %p260 = scmp.ne.s32.totalorder %s243, %s259
      %p261 = scmp.eq.s32.totalorder %s36, 0
      %p262 = por %p260, %p261
      %s263 = ssub.s32 %s37, %s49
      %s264 = ssub.s32 %s38, %s45
      %s265 = sor.u32 %s263, %s264
      %p266 = scmp.eq.s32.totalorder %s265, 0
      %s268 = sadd.s32 %s267, 1
      %s269 = scalar_select %p266, %s267, %s268
      %p272 = pneg %p266
      %p273 = scmp.eq.s32.totalorder %s30, 1
      %p274 = por %p272, %p273
      %p275 = scmp.ne.s32.totalorder %s267, %s270
      %p276 = scmp.eq.s32.totalorder %s30, 0
      %p277 = por %p275, %p276
      %p278 = scmp.ne.s32.totalorder %s267, %s270
      %p279 = scmp.eq.s32.totalorder %s35, 1
      %p280 = por %p278, %p279
      %p281 = scmp.ne.s32.totalorder %s270, %s271
      %p282 = scmp.eq.s32.totalorder %s35, 0
      %p283 = por %p281, %p282
      %p284 = scmp.ne.s32.totalorder %s270, %s271
      %p285 = scmp.eq.s32.totalorder %s36, 1
      %p286 = por %p284, %p285
      %p288 = scmp.ne.s32.totalorder %s271, %s287
      %p289 = scmp.eq.s32.totalorder %s36, 0
      %p290 = por %p288, %p289
      %p291 = scmp.le.s32.totalorder 1, %s30
      %p292 = scmp.lt.s32.totalorder %s30, 3
      %p293 = pnand %p291, %p292
      %p294 = pneg %p293
      // Predicated region
      $region9: #{tpu_custom_call.1} parent=5 // pred_check
        _
      $region10: #{tpu_custom_call.1} parent=5 // pred_check_branch
        %296 = sbr.rel (%p293) target = $region12
      $region11: #{tpu_custom_call.1} parent=5 // pred_region
        %s297 = ssub.s32 %s30, 1
        // Predicated region
        $region13: #{tpu_custom_call.1} parent=11 // pred_check
          %p298 = pneg %p143
        $region14: #{tpu_custom_call.1} parent=11 // pred_check_branch
          %300 = sbr.rel (%p298) target = $region16
        $region15: #{tpu_custom_call.1} parent=11 // pred_region
          %302 = vsyncadd [#allocation9], 0
          %s303 = sshll.u32 %s3, 4
          %s304 = int_to_ptr.hbm [resolvable:$true] %s303
          %s305 = sshll.u32 [#allocation8], 4
          %s306 = int_to_ptr.vmem [resolvable:$true] %s305
          %311 = dma.hbm_to_vmem [thread:$0]  %s304, 1024, %s306, [#allocation9], 64, 64, 4
        $region16: #{tpu_custom_call.1} parent=11 // pred_fallthru
          _
        // Predicated region
        $region17: #{tpu_custom_call.1} parent=11 // pred_check
          %p312 = pneg %p164
        $region18: #{tpu_custom_call.1} parent=11 // pred_check_branch
          %314 = sbr.rel (%p312) target = $region20
        $region19: #{tpu_custom_call.1} parent=11 // pred_region
          %316 = vsyncadd [#allocation9], 0
          %s317 = sshll.u32 %s4, 4
          %s318 = int_to_ptr.hbm [resolvable:$true] %s317
          %s319 = sshll.u32 [#allocation10], 4
          %s320 = int_to_ptr.vmem [resolvable:$true] %s319
          %325 = dma.hbm_to_vmem [thread:$0]  %s318, 1024, %s320, [#allocation9], 64, 64, 4
        $region20: #{tpu_custom_call.1} parent=11 // pred_fallthru
          _
        // Predicated region
        $region21: #{tpu_custom_call.1} parent=11 // pred_check
          %p326 = pneg %p185
        $region22: #{tpu_custom_call.1} parent=11 // pred_check_branch
          %328 = sbr.rel (%p326) target = $region24
        $region23: #{tpu_custom_call.1} parent=11 // pred_region
          %330 = vsyncadd [#allocation12], 0
          %s331 = sshll.u32 %s5, 4
          %s332 = int_to_ptr.hbm [resolvable:$true] %s331
          %s333 = sshll.u32 [#allocation11], 4
          %s334 = int_to_ptr.vmem [resolvable:$true] %s333
          %339 = dma.hbm_to_vmem [thread:$0]  %s332, 1024, %s334, [#allocation12], 64, 64, 4
        $region24: #{tpu_custom_call.1} parent=11 // pred_fallthru
          _
        // Predicated region
        $region25: #{tpu_custom_call.1} parent=11 // pred_check
          %p340 = pneg %p206
        $region26: #{tpu_custom_call.1} parent=11 // pred_check_branch
          %342 = sbr.rel (%p340) target = $region28
        $region27: #{tpu_custom_call.1} parent=11 // pred_region
          %344 = vsyncadd [#allocation12], 0
          %s345 = sshll.u32 %s6, 4
          %s346 = int_to_ptr.hbm [resolvable:$true] %s345
          %s347 = sshll.u32 [#allocation13], 4
          %s348 = int_to_ptr.vmem [resolvable:$true] %s347
          %353 = dma.hbm_to_vmem [thread:$0]  %s346, 1024, %s348, [#allocation12], 64, 64, 4
        $region28: #{tpu_custom_call.1} parent=11 // pred_fallthru
          _
        // Predicated region
        $region29: #{tpu_custom_call.1} parent=11 // pred_check
          %p354 = pneg %p227
        $region30: #{tpu_custom_call.1} parent=11 // pred_check_branch
          %356 = sbr.rel (%p354) target = $region32
        $region31: #{tpu_custom_call.1} parent=11 // pred_region
          _
        $region32: #{tpu_custom_call.1} parent=11 // pred_fallthru
          _
      $region12: #{tpu_custom_call.1} parent=5 // pred_fallthru
        _
      %p357 = scmp.lt.s32.totalorder %s30, 2
      // Predicated region
      $region33: #{tpu_custom_call.1} parent=5 // pred_check
        %p358 = pneg %p357
      $region34: #{tpu_custom_call.1} parent=5 // pred_check_branch
        %360 = sbr.rel (%p358) target = $region36
      $region35: #{tpu_custom_call.1} parent=5 // pred_region
        // Predicated region
        $region37: #{tpu_custom_call.1} parent=35 // pred_check
          %p361 = pneg %p62
        $region38: #{tpu_custom_call.1} parent=35 // pred_check_branch
          %363 = sbr.rel (%p361) target = $region40
        $region39: #{tpu_custom_call.1} parent=35 // pred_region
          %s364 = sand.u32 %s52, 1
          %s365 = scalar_lea.sflag [#allocation3], %s364
          %s366 = sand.u32 %s52, 1
          %s367 = smul.addr %s366, 128
          %s368 = scalar_lea.vmem [#allocation2], %s367
          %370 = vsyncadd %s365, 0
          %s371 = smul.addr %s37, 16
          %s372 = smul.addr %s371, 8
          %s373 = scalar_lea.hbm %s0, %s372
          %s374 = sshll.u32 %s373, 4
          %s375 = int_to_ptr.hbm [resolvable:$true] %s374
          %s376 = sshll.u32 %s368, 4
          %s377 = int_to_ptr.vmem [resolvable:$true] %s376
          %382 = dma.hbm_to_vmem [thread:$0]  %s375, 2048, %s377, %s365, 128, 128, 8
        $region40: #{tpu_custom_call.1} parent=35 // pred_fallthru
          _
        // Predicated region
        $region41: #{tpu_custom_call.1} parent=35 // pred_check
          %p383 = pneg %p88
        $region42: #{tpu_custom_call.1} parent=35 // pred_check_branch
          %385 = sbr.rel (%p383) target = $region44
        $region43: #{tpu_custom_call.1} parent=35 // pred_region
          %s386 = sand.u32 %s30, 1
          %s387 = scalar_lea.sflag [#allocation6], %s386
          %s388 = sand.u32 %s78, 1
          %s389 = smul.addr %s388, 128
          %s390 = scalar_lea.vmem [#allocation5], %s389
          %392 = vsyncadd %s387, 0
          %s393 = smul.addr %s37, 16
          %s394 = smul.addr %s393, 8
          %s395 = scalar_lea.hbm %s1, %s394
          %s396 = sshll.u32 %s395, 4
          %s397 = int_to_ptr.hbm [resolvable:$true] %s396
          %s398 = sshll.u32 %s390, 4
          %s399 = int_to_ptr.vmem [resolvable:$true] %s398
          %404 = dma.hbm_to_vmem [thread:$0]  %s397, 2048, %s399, %s387, 128, 128, 8
        $region44: #{tpu_custom_call.1} parent=35 // pred_fallthru
          _
        // Predicated region
        $region45: #{tpu_custom_call.1} parent=35 // pred_check
          %p405 = pneg %p116
        $region46: #{tpu_custom_call.1} parent=35 // pred_check_branch
          %407 = sbr.rel (%p405) target = $region48
        $region47: #{tpu_custom_call.1} parent=35 // pred_region
          %s408 = sand.u32 %s30, 1
          %s409 = scalar_lea.sflag [#allocation6], %s408
          %s410 = sand.u32 %s106, 1
          %s411 = smul.addr %s410, 8
          %s412 = scalar_lea.vmem [#allocation7], %s411
          %414 = vsyncadd %s409, 0
          %s415 = sadd.s32 %s38, %s37
          %s416 = smul.addr %s415, 8
          %s417 = scalar_lea.hbm %s2, %s416
          %s419 = sshll.u32 %s417, 4
          %s420 = int_to_ptr.hbm [resolvable:$true] %s419
          %s421 = sshll.u32 %s412, 4
          %s422 = int_to_ptr.vmem [resolvable:$true] %s421
          %424 = dma.hbm_to_vmem [thread:$0]  %s420, 128, %s422, %s409
        $region48: #{tpu_custom_call.1} parent=35 // pred_fallthru
          _
      $region36: #{tpu_custom_call.1} parent=5 // pred_fallthru
        _
      %p425 = scmp.le.s32.totalorder 1, %s30
      %p426 = scmp.lt.s32.totalorder %s30, 3
      %p427 = pnand %p425, %p426
      %p428 = pneg %p427
      // Predicated region
      $region49: #{tpu_custom_call.1} parent=5 // pred_check
        _
      $region50: #{tpu_custom_call.1} parent=5 // pred_check_branch
        %430 = sbr.rel (%p427) target = $region52
      $region51: #{tpu_custom_call.1} parent=5 // pred_region
        %s431 = ssub.s32 %s30, 1
        %s432 = sand.u32 %s55, 1
        %s433 = scalar_lea.sflag [#allocation3], %s432
        %s434 = sand.u32 %s55, 1
        %s435 = smul.addr %s434, 128
        %s436 = scalar_lea.vmem [#allocation2], %s435
        // Predicated region
        $region53: #{tpu_custom_call.1} parent=51 // pred_check
          %p437 = pneg %p68
        $region54: #{tpu_custom_call.1} parent=51 // pred_check_branch
          %439 = sbr.rel (%p437) target = $region56
        $region55: #{tpu_custom_call.1} parent=51 // pred_region
          %441 = dma.done %s433, 2048
        $region56: #{tpu_custom_call.1} parent=51 // pred_fallthru
          _
        %s442 = sand.u32 %s35, 1
        %s443 = scalar_lea.sflag [#allocation6], %s442
        %s444 = sand.u32 %s81, 1
        %s445 = smul.addr %s444, 128
        %s446 = scalar_lea.vmem [#allocation5], %s445
        // Predicated region
        $region57: #{tpu_custom_call.1} parent=51 // pred_check
          %p447 = pneg %p94
        $region58: #{tpu_custom_call.1} parent=51 // pred_check_branch
          %449 = sbr.rel (%p447) target = $region60
        $region59: #{tpu_custom_call.1} parent=51 // pred_region
          %451 = dma.done %s443, 2048
        $region60: #{tpu_custom_call.1} parent=51 // pred_fallthru
          _
        %s452 = sand.u32 %s35, 1
        %s453 = scalar_lea.sflag [#allocation6], %s452
        %s454 = sand.u32 %s109, 1
        %s455 = smul.addr %s454, 8
        %s456 = scalar_lea.vmem [#allocation7], %s455
        // Predicated region
        $region61: #{tpu_custom_call.1} parent=51 // pred_check
          %p457 = pneg %p122
        $region62: #{tpu_custom_call.1} parent=51 // pred_check_branch
          %459 = sbr.rel (%p457) target = $region64
        $region63: #{tpu_custom_call.1} parent=51 // pred_region
          %461 = dma.done %s453, 128
        $region64: #{tpu_custom_call.1} parent=51 // pred_fallthru
          _
        // Predicated region
        $region65: #{tpu_custom_call.1} parent=51 // pred_check
          %p462 = pneg %p143
        $region66: #{tpu_custom_call.1} parent=51 // pred_check_branch
          %464 = sbr.rel (%p462) target = $region68
        $region67: #{tpu_custom_call.1} parent=51 // pred_region
          %466 = dma.done [#allocation9], 1024
        $region68: #{tpu_custom_call.1} parent=51 // pred_fallthru
          _
        // Predicated region
        $region69: #{tpu_custom_call.1} parent=51 // pred_check
          %p467 = pneg %p164
        $region70: #{tpu_custom_call.1} parent=51 // pred_check_branch
          %469 = sbr.rel (%p467) target = $region72
        $region71: #{tpu_custom_call.1} parent=51 // pred_region
          %471 = dma.done [#allocation9], 1024
        $region72: #{tpu_custom_call.1} parent=51 // pred_fallthru
          _
        // Predicated region
        $region73: #{tpu_custom_call.1} parent=51 // pred_check
          %p472 = pneg %p185
        $region74: #{tpu_custom_call.1} parent=51 // pred_check_branch
          %474 = sbr.rel (%p472) target = $region76
        $region75: #{tpu_custom_call.1} parent=51 // pred_region
          %476 = dma.done [#allocation12], 1024
        $region76: #{tpu_custom_call.1} parent=51 // pred_fallthru
          _
        // Predicated region
        $region77: #{tpu_custom_call.1} parent=51 // pred_check
          %p477 = pneg %p206
        $region78: #{tpu_custom_call.1} parent=51 // pred_check_branch
          %479 = sbr.rel (%p477) target = $region80
        $region79: #{tpu_custom_call.1} parent=51 // pred_region
          %481 = dma.done [#allocation12], 1024
        $region80: #{tpu_custom_call.1} parent=51 // pred_fallthru
          _
        %s482 = sand.u32 %s55, 1
        %s483 = scalar_lea.sflag [#allocation3], %s482
        %s484 = sand.u32 %s55, 1
        %s485 = smul.addr %s484, 128
        %s486 = scalar_lea.vmem [#allocation2], %s485
        %p487 = pneg %p68
        %p488 = pneg %p65
        %s489 = sand.u32 %s35, 1
        %s490 = scalar_lea.sflag [#allocation6], %s489
        %s491 = sand.u32 %s81, 1
        %s492 = smul.addr %s491, 128
        %s493 = scalar_lea.vmem [#allocation5], %s492
        %p494 = pneg %p94
        %p495 = pneg %p91
        %s496 = sand.u32 %s35, 1
        %s497 = scalar_lea.sflag [#allocation6], %s496
        %s498 = sand.u32 %s109, 1
        %s499 = smul.addr %s498, 8
        %s500 = scalar_lea.vmem [#allocation7], %s499
        %p501 = pneg %p122
        %p502 = pneg %p119
        %p503 = pneg %p143
        %p504 = pneg %p140
        %p505 = pneg %p164
        %p506 = pneg %p161
        %p507 = pneg %p185
        %p508 = pneg %p182
        %p509 = pneg %p206
        %p510 = pneg %p203
        %p511 = pneg %p227
        %p512 = pneg %p224
        %p513 = pneg %p255
        %p514 = pneg %p252
        %s515 = sand.u32 %s242, 1
        %s516 = scalar_lea.sflag [#allocation4], %s515
        %s517 = sand.u32 %s242, 1
        %s518 = smul.addr %s517, 8
        %s519 = scalar_lea.vmem [#allocation14], %s518
        %p520 = pneg %p283
        %p521 = pneg %p280
        %s522 = sand.u32 %s270, 1
        %s523 = scalar_lea.sflag [#allocation16], %s522
        %s524 = sand.u32 %s270, 1
        %s525 = smul.addr %s524, 8
        %s526 = scalar_lea.vmem [#allocation15], %s525
        %v527 = vld [vmem:[%s436] sm:$0xff]
        %v528 = vld [vmem:[%s436 + $0x8] sm:$0xff]
        %v529 = vld [vmem:[%s436 + $0x10] sm:$0xff]
        %v530 = vld [vmem:[%s436 + $0x18] sm:$0xff]
        %v531 = vld [vmem:[%s436 + $0x20] sm:$0xff]
        %v532 = vld [vmem:[%s436 + $0x28] sm:$0xff]
        %v533 = vld [vmem:[%s436 + $0x30] sm:$0xff]
        %v534 = vld [vmem:[%s436 + $0x38] sm:$0xff]
        %v535 = vld [vmem:[%s436 + $0x40] sm:$0xff]
        %v536 = vld [vmem:[%s436 + $0x48] sm:$0xff]
        %v537 = vld [vmem:[%s436 + $0x50] sm:$0xff]
        %v538 = vld [vmem:[%s436 + $0x58] sm:$0xff]
        %v539 = vld [vmem:[%s436 + $0x60] sm:$0xff]
        %v540 = vld [vmem:[%s436 + $0x68] sm:$0xff]
        %v541 = vld [vmem:[%s436 + $0x70] sm:$0xff]
        %v542 = vld [vmem:[%s436 + $0x78] sm:$0xff]
        %v543 = vpack.c.bf16 %v528, %v527
        %v544 = vpack.c.bf16 %v530, %v529
        %v545 = vpack.c.bf16 %v532, %v531
        %v546 = vpack.c.bf16 %v534, %v533
        %v547 = vpack.c.bf16 %v536, %v535
        %v548 = vpack.c.bf16 %v538, %v537
        %v549 = vpack.c.bf16 %v540, %v539
        %v550 = vpack.c.bf16 %v542, %v541
        %v551 = vld [vmem:[#allocation8] sm:$0xf]
        %v552 = vld [vmem:[#allocation8 + $0x4] sm:$0xf]
        %v553 = vld [vmem:[#allocation8 + $0x8] sm:$0xf]
        %v554 = vld [vmem:[#allocation8 + $0xc] sm:$0xf]
        %v555 = vld [vmem:[#allocation8 + $0x10] sm:$0xf]
        %v556 = vld [vmem:[#allocation8 + $0x14] sm:$0xf]
        %v557 = vld [vmem:[#allocation8 + $0x18] sm:$0xf]
        %v558 = vld [vmem:[#allocation8 + $0x1c] sm:$0xf]
        %v559 = vld [vmem:[#allocation8 + $0x20] sm:$0xf]
        %v560 = vld [vmem:[#allocation8 + $0x24] sm:$0xf]
        %v561 = vld [vmem:[#allocation8 + $0x28] sm:$0xf]
        %v562 = vld [vmem:[#allocation8 + $0x2c] sm:$0xf]
        %v563 = vld [vmem:[#allocation8 + $0x30] sm:$0xf]
        %v564 = vld [vmem:[#allocation8 + $0x34] sm:$0xf]
        %v565 = vld [vmem:[#allocation8 + $0x38] sm:$0xf]
        %v566 = vld [vmem:[#allocation8 + $0x3c] sm:$0xf]
        %v583 = vunpack.c.l.b16 %v551
        %v584 = vunpack.c.l.b16 %v552
        %v585 = vunpack.c.l.b16 %v553
        %v586 = vunpack.c.l.b16 %v554
        %v587 = vunpack.c.l.b16 %v555
        %v588 = vunpack.c.l.b16 %v556
        %v589 = vunpack.c.l.b16 %v557
        %v590 = vunpack.c.l.b16 %v558
        %v591 = vunpack.c.l.b16 %v559
        %v592 = vunpack.c.l.b16 %v560
        %v593 = vunpack.c.l.b16 %v561
        %v594 = vunpack.c.l.b16 %v562
        %v595 = vunpack.c.l.b16 %v563
        %v596 = vunpack.c.l.b16 %v564
        %v597 = vunpack.c.l.b16 %v565
        %v598 = vunpack.c.l.b16 %v566
        %v599 = vpack.c.b16 %v584, %v583
        %v600 = vpack.c.b16 %v586, %v585
        %v601 = vpack.c.b16 %v588, %v587
        %v602 = vpack.c.b16 %v590, %v589
        %v603 = vpack.c.b16 %v592, %v591
        %v604 = vpack.c.b16 %v594, %v593
        %v605 = vpack.c.b16 %v596, %v595
        %v606 = vpack.c.b16 %v598, %v597
        %615 = vmatpush.bf16.msra.mxu0 %v606
        %616 = vmatpush.bf16.msra.mxu0 %v605
        %617 = vmatpush.bf16.msra.mxu0 %v604
        %618 = vmatpush.bf16.msra.mxu0 %v603
        %619 = vmatpush.bf16.msra.mxu0 %v602
        %620 = vmatpush.bf16.msra.mxu0 %v601
        %621 = vmatpush.bf16.msra.mxu0 %v600
        %622 = vmatpush.bf16.msra.mxu0 %v599
        %623 = vmatmul.bf16.gmra.mxu0 %v543
        %v624 = vpop.f32.mrf.mxu0
        %v625 = vadd.f32 0.0, %v624
        %v626 = vpop.f32.mrf.mxu0
        %v627 = vadd.f32 0.0, %v626
        %628 = vmatmul.bf16.gmra.mxu0 %v544
        %v629 = vpop.f32.mrf.mxu0
        %v630 = vadd.f32 0.0, %v629
        %v631 = vpop.f32.mrf.mxu0
        %v632 = vadd.f32 0.0, %v631
        %633 = vmatmul.bf16.gmra.mxu0 %v545
        %v634 = vpop.f32.mrf.mxu0
        %v635 = vadd.f32 0.0, %v634
        %v636 = vpop.f32.mrf.mxu0
        %v637 = vadd.f32 0.0, %v636
        %638 = vmatmul.bf16.gmra.mxu0 %v546
        %v639 = vpop.f32.mrf.mxu0
        %v640 = vadd.f32 0.0, %v639
        %v641 = vpop.f32.mrf.mxu0
        %v642 = vadd.f32 0.0, %v641
        %643 = vmatmul.bf16.gmra.mxu0 %v547
        %v644 = vpop.f32.mrf.mxu0
        %v645 = vadd.f32 0.0, %v644
        %v646 = vpop.f32.mrf.mxu0
        %v647 = vadd.f32 0.0, %v646
        %648 = vmatmul.bf16.gmra.mxu0 %v548
        %v649 = vpop.f32.mrf.mxu0
        %v650 = vadd.f32 0.0, %v649
        %v651 = vpop.f32.mrf.mxu0
        %v652 = vadd.f32 0.0, %v651
        %653 = vmatmul.bf16.gmra.mxu0 %v549
        %v654 = vpop.f32.mrf.mxu0
        %v655 = vadd.f32 0.0, %v654
        %v656 = vpop.f32.mrf.mxu0
        %v657 = vadd.f32 0.0, %v656
        %658 = vmatmul.bf16.gmra.mxu0 %v550
        %v659 = vpop.f32.mrf.mxu0
        %v660 = vadd.f32 0.0, %v659
        %v661 = vpop.f32.mrf.mxu0
        %v662 = vadd.f32 0.0, %v661
        %663 = vdwg.mxu0
        %v664 = vld [vmem:[%s446] sm:$0xff]
        %v665 = vld [vmem:[%s446 + $0x8] sm:$0xff]
        %v666 = vld [vmem:[%s446 + $0x10] sm:$0xff]
        %v667 = vld [vmem:[%s446 + $0x18] sm:$0xff]
        %v668 = vld [vmem:[%s446 + $0x20] sm:$0xff]
        %v669 = vld [vmem:[%s446 + $0x28] sm:$0xff]
        %v670 = vld [vmem:[%s446 + $0x30] sm:$0xff]
        %v671 = vld [vmem:[%s446 + $0x38] sm:$0xff]
        %v672 = vld [vmem:[%s446 + $0x40] sm:$0xff]
        %v673 = vld [vmem:[%s446 + $0x48] sm:$0xff]
        %v674 = vld [vmem:[%s446 + $0x50] sm:$0xff]
        %v675 = vld [vmem:[%s446 + $0x58] sm:$0xff]
        %v676 = vld [vmem:[%s446 + $0x60] sm:$0xff]
        %v677 = vld [vmem:[%s446 + $0x68] sm:$0xff]
        %v678 = vld [vmem:[%s446 + $0x70] sm:$0xff]
        %v679 = vld [vmem:[%s446 + $0x78] sm:$0xff]
        %v680 = vpack.c.bf16 %v665, %v664
        %v681 = vpack.c.bf16 %v667, %v666
        %v682 = vpack.c.bf16 %v669, %v668
        %v683 = vpack.c.bf16 %v671, %v670
        %v684 = vpack.c.bf16 %v673, %v672
        %v685 = vpack.c.bf16 %v675, %v674
        %v686 = vpack.c.bf16 %v677, %v676
        %v687 = vpack.c.bf16 %v679, %v678
        %v688 = vld [vmem:[#allocation10] sm:$0xf]
        %v689 = vld [vmem:[#allocation10 + $0x4] sm:$0xf]
        %v690 = vld [vmem:[#allocation10 + $0x8] sm:$0xf]
        %v691 = vld [vmem:[#allocation10 + $0xc] sm:$0xf]
        %v692 = vld [vmem:[#allocation10 + $0x10] sm:$0xf]
        %v693 = vld [vmem:[#allocation10 + $0x14] sm:$0xf]
        %v694 = vld [vmem:[#allocation10 + $0x18] sm:$0xf]
        %v695 = vld [vmem:[#allocation10 + $0x1c] sm:$0xf]
        %v696 = vld [vmem:[#allocation10 + $0x20] sm:$0xf]
        %v697 = vld [vmem:[#allocation10 + $0x24] sm:$0xf]
        %v698 = vld [vmem:[#allocation10 + $0x28] sm:$0xf]
        %v699 = vld [vmem:[#allocation10 + $0x2c] sm:$0xf]
        %v700 = vld [vmem:[#allocation10 + $0x30] sm:$0xf]
        %v701 = vld [vmem:[#allocation10 + $0x34] sm:$0xf]
        %v702 = vld [vmem:[#allocation10 + $0x38] sm:$0xf]
        %v703 = vld [vmem:[#allocation10 + $0x3c] sm:$0xf]
        %v720 = vunpack.c.l.b16 %v688
        %v721 = vunpack.c.l.b16 %v689
        %v722 = vunpack.c.l.b16 %v690
        %v723 = vunpack.c.l.b16 %v691
        %v724 = vunpack.c.l.b16 %v692
        %v725 = vunpack.c.l.b16 %v693
        %v726 = vunpack.c.l.b16 %v694
        %v727 = vunpack.c.l.b16 %v695
        %v728 = vunpack.c.l.b16 %v696
        %v729 = vunpack.c.l.b16 %v697
        %v730 = vunpack.c.l.b16 %v698
        %v731 = vunpack.c.l.b16 %v699
        %v732 = vunpack.c.l.b16 %v700
        %v733 = vunpack.c.l.b16 %v701
        %v734 = vunpack.c.l.b16 %v702
        %v735 = vunpack.c.l.b16 %v703
        %v736 = vpack.c.b16 %v721, %v720
        %v737 = vpack.c.b16 %v723, %v722
        %v738 = vpack.c.b16 %v725, %v724
        %v739 = vpack.c.b16 %v727, %v726
        %v740 = vpack.c.b16 %v729, %v728
        %v741 = vpack.c.b16 %v731, %v730
        %v742 = vpack.c.b16 %v733, %v732
        %v743 = vpack.c.b16 %v735, %v734
        %752 = vmatpush.bf16.msra.mxu0 %v743
        %753 = vmatpush.bf16.msra.mxu0 %v742
        %754 = vmatpush.bf16.msra.mxu0 %v741
        %755 = vmatpush.bf16.msra.mxu0 %v740
        %756 = vmatpush.bf16.msra.mxu0 %v739
        %757 = vmatpush.bf16.msra.mxu0 %v738
        %758 = vmatpush.bf16.msra.mxu0 %v737
        %759 = vmatpush.bf16.msra.mxu0 %v736
        %760 = vmatmul.bf16.gmra.mxu0 %v680
        %v761 = vpop.f32.mrf.mxu0
        %v762 = vadd.f32 0.0, %v761
        %v763 = vpop.f32.mrf.mxu0
        %v764 = vadd.f32 0.0, %v763
        %765 = vmatmul.bf16.gmra.mxu0 %v681
        %v766 = vpop.f32.mrf.mxu0
        %v767 = vadd.f32 0.0, %v766
        %v768 = vpop.f32.mrf.mxu0
        %v769 = vadd.f32 0.0, %v768
        %770 = vmatmul.bf16.gmra.mxu0 %v682
        %v771 = vpop.f32.mrf.mxu0
        %v772 = vadd.f32 0.0, %v771
        %v773 = vpop.f32.mrf.mxu0
        %v774 = vadd.f32 0.0, %v773
        %775 = vmatmul.bf16.gmra.mxu0 %v683
        %v776 = vpop.f32.mrf.mxu0
        %v777 = vadd.f32 0.0, %v776
        %v778 = vpop.f32.mrf.mxu0
        %v779 = vadd.f32 0.0, %v778
        %780 = vmatmul.bf16.gmra.mxu0 %v684
        %v781 = vpop.f32.mrf.mxu0
        %v782 = vadd.f32 0.0, %v781
        %v783 = vpop.f32.mrf.mxu0
        %v784 = vadd.f32 0.0, %v783
        %785 = vmatmul.bf16.gmra.mxu0 %v685
        %v786 = vpop.f32.mrf.mxu0
        %v787 = vadd.f32 0.0, %v786
        %v788 = vpop.f32.mrf.mxu0
        %v789 = vadd.f32 0.0, %v788
        %790 = vmatmul.bf16.gmra.mxu0 %v686
        %v791 = vpop.f32.mrf.mxu0
        %v792 = vadd.f32 0.0, %v791
        %v793 = vpop.f32.mrf.mxu0
        %v794 = vadd.f32 0.0, %v793
        %795 = vmatmul.bf16.gmra.mxu0 %v687
        %v796 = vpop.f32.mrf.mxu0
        %v797 = vadd.f32 0.0, %v796
        %v798 = vpop.f32.mrf.mxu0
        %v799 = vadd.f32 0.0, %v798
        %800 = vdwg.mxu0
        %v801 = vld [vmem:[%s456] sm:$0xff]
        %v802 = vpack.c.bf16 %v801, %v801
        %v803 = vld [vmem:[#allocation11] sm:$0xf]
        %v804 = vld [vmem:[#allocation11 + $0x4] sm:$0xf]
        %v805 = vld [vmem:[#allocation11 + $0x8] sm:$0xf]
        %v806 = vld [vmem:[#allocation11 + $0xc] sm:$0xf]
        %v807 = vld [vmem:[#allocation11 + $0x10] sm:$0xf]
        %v808 = vld [vmem:[#allocation11 + $0x14] sm:$0xf]
        %v809 = vld [vmem:[#allocation11 + $0x18] sm:$0xf]
        %v810 = vld [vmem:[#allocation11 + $0x1c] sm:$0xf]
        %v811 = vld [vmem:[#allocation11 + $0x20] sm:$0xf]
        %v812 = vld [vmem:[#allocation11 + $0x24] sm:$0xf]
        %v813 = vld [vmem:[#allocation11 + $0x28] sm:$0xf]
        %v814 = vld [vmem:[#allocation11 + $0x2c] sm:$0xf]
        %v815 = vld [vmem:[#allocation11 + $0x30] sm:$0xf]
        %v816 = vld [vmem:[#allocation11 + $0x34] sm:$0xf]
        %v817 = vld [vmem:[#allocation11 + $0x38] sm:$0xf]
        %v818 = vld [vmem:[#allocation11 + $0x3c] sm:$0xf]
        %v835 = vunpack.c.l.b16 %v803
        %v836 = vunpack.c.l.b16 %v804
        %v837 = vunpack.c.l.b16 %v805
        %v838 = vunpack.c.l.b16 %v806
        %v839 = vunpack.c.l.b16 %v807
        %v840 = vunpack.c.l.b16 %v808
        %v841 = vunpack.c.l.b16 %v809
        %v842 = vunpack.c.l.b16 %v810
        %v843 = vunpack.c.l.b16 %v811
        %v844 = vunpack.c.l.b16 %v812
        %v845 = vunpack.c.l.b16 %v813
        %v846 = vunpack.c.l.b16 %v814
        %v847 = vunpack.c.l.b16 %v815
        %v848 = vunpack.c.l.b16 %v816
        %v849 = vunpack.c.l.b16 %v817
        %v850 = vunpack.c.l.b16 %v818
        %v851 = vpack.c.b16 %v836, %v835
        %v852 = vpack.c.b16 %v838, %v837
        %v853 = vpack.c.b16 %v840, %v839
        %v854 = vpack.c.b16 %v842, %v841
        %v855 = vpack.c.b16 %v844, %v843
        %v856 = vpack.c.b16 %v846, %v845
        %v857 = vpack.c.b16 %v848, %v847
        %v858 = vpack.c.b16 %v850, %v849
        %867 = vmatpush.bf16.msra.mxu0 %v858
        %868 = vmatpush.bf16.msra.mxu0 %v857
        %869 = vmatpush.bf16.msra.mxu0 %v856
        %870 = vmatpush.bf16.msra.mxu0 %v855
        %871 = vmatpush.bf16.msra.mxu0 %v854
        %872 = vmatpush.bf16.msra.mxu0 %v853
        %873 = vmatpush.bf16.msra.mxu0 %v852
        %874 = vmatpush.bf16.msra.mxu0 %v851
        %875 = vmatmul.bf16.gmra.mxu0 %v802
        %v876 = vpop.f32.mrf.mxu0
        %v877 = vadd.f32 0.0, %v876
        %v878 = vpop.f32.mrf.mxu0
        %879 = vdwg.mxu0
        %v880 = vpack.c.bf16 %v877, %v877
        %v881 = vpack.c.bf16 %v764, %v762
        %v882 = vpack.c.bf16 %v769, %v767
        %v883 = vpack.c.bf16 %v774, %v772
        %v884 = vpack.c.bf16 %v779, %v777
        %v885 = vpack.c.bf16 %v784, %v782
        %v886 = vpack.c.bf16 %v789, %v787
        %v887 = vpack.c.bf16 %v794, %v792
        %v888 = vpack.c.bf16 %v799, %v797
        %889 = vmatpush.bf16.xpose.msra.mxu0 %v888
        %890 = vmatpush.bf16.xpose.msra.mxu0 %v887
        %891 = vmatpush.bf16.xpose.msra.mxu0 %v886
        %892 = vmatpush.bf16.xpose.msra.mxu0 %v885
        %893 = vmatpush.bf16.xpose.msra.mxu0 %v884
        %894 = vmatpush.bf16.xpose.msra.mxu0 %v883
        %895 = vmatpush.bf16.xpose.msra.mxu0 %v882
        %896 = vmatpush.bf16.xpose.msra.mxu0 %v881
        %897 = vmatmul.bf16.gmra.mxu0 %v880
        %v898 = vpop.f32.mrf.mxu0
        %v899 = vadd.f32 0.0, %v898
        %v900 = vpop.f32.mrf.mxu0
        %901 = vdwg.mxu0
        %v902 = vlaneseq
        %v903 = vand.u32 %v902, 127
        %vm904 = vcmp.lt.s32.totalorder %v903, 8
        %v905 = vsel %vm904, %v899, -3.4028235e+38
        %906 = vmax.xlane.f32.xlu0 %v905
        %v907 = vpop.xlane.xlu0 %906
        %v908 = vsub.f32 %v905, %v907
        %v909 = vmul.f32 %v908, 1.442695
        %v910 = vpow.pop %v909
        %911 = vadd.xlane.f32.xlu0 %v910
        %v912 = vpop.xlane.xlu0 %911
        %v913 = vrcp.pop %v912
        %v914 = vmul.f32 %v910, %v913
        %v915 = vpack.c.bf16 %v914, %v914
        %v916 = vpack.c.bf16 %v627, %v625
        %v917 = vpack.c.bf16 %v632, %v630
        %v918 = vpack.c.bf16 %v637, %v635
        %v919 = vpack.c.bf16 %v642, %v640
        %v920 = vpack.c.bf16 %v647, %v645
        %v921 = vpack.c.bf16 %v652, %v650
        %v922 = vpack.c.bf16 %v657, %v655
        %v923 = vpack.c.bf16 %v662, %v660
        %924 = vmatpush.bf16.msra.mxu0 %v923
        %925 = vmatpush.bf16.msra.mxu0 %v922
        %926 = vmatpush.bf16.msra.mxu0 %v921
        %927 = vmatpush.bf16.msra.mxu0 %v920
        %928 = vmatpush.bf16.msra.mxu0 %v919
        %929 = vmatpush.bf16.msra.mxu0 %v918
        %930 = vmatpush.bf16.msra.mxu0 %v917
        %931 = vmatpush.bf16.msra.mxu0 %v916
        %932 = vmatmul.bf16.gmra.mxu0 %v915
        %v933 = vpop.f32.mrf.mxu0
        %v934 = vadd.f32 0.0, %v933
        %v935 = vpop.f32.mrf.mxu0
        %936 = vdwg.mxu0
        %v937 = vpack.c.bf16 %v934, %v934
        %v938 = vld [vmem:[#allocation13] sm:$0xf]
        %v939 = vld [vmem:[#allocation13 + $0x4] sm:$0xf]
        %v940 = vld [vmem:[#allocation13 + $0x8] sm:$0xf]
        %v941 = vld [vmem:[#allocation13 + $0xc] sm:$0xf]
        %v942 = vld [vmem:[#allocation13 + $0x10] sm:$0xf]
        %v943 = vld [vmem:[#allocation13 + $0x14] sm:$0xf]
        %v944 = vld [vmem:[#allocation13 + $0x18] sm:$0xf]
        %v945 = vld [vmem:[#allocation13 + $0x1c] sm:$0xf]
        %v946 = vld [vmem:[#allocation13 + $0x20] sm:$0xf]
        %v947 = vld [vmem:[#allocation13 + $0x24] sm:$0xf]
        %v948 = vld [vmem:[#allocation13 + $0x28] sm:$0xf]
        %v949 = vld [vmem:[#allocation13 + $0x2c] sm:$0xf]
        %v950 = vld [vmem:[#allocation13 + $0x30] sm:$0xf]
        %v951 = vld [vmem:[#allocation13 + $0x34] sm:$0xf]
        %v952 = vld [vmem:[#allocation13 + $0x38] sm:$0xf]
        %v953 = vld [vmem:[#allocation13 + $0x3c] sm:$0xf]
        %v954 = vld [vmem:[%s7] sm:$0x1]
        %v956 = vperm.slane %v954, 0
        %v974 = vunpack.c.l.b16 %v938
        %v975 = vunpack.c.l.b16 %v939
        %v976 = vunpack.c.l.b16 %v940
        %v977 = vunpack.c.l.b16 %v941
        %v978 = vunpack.c.l.b16 %v942
        %v979 = vunpack.c.l.b16 %v943
        %v980 = vunpack.c.l.b16 %v944
        %v981 = vunpack.c.l.b16 %v945
        %v982 = vunpack.c.l.b16 %v946
        %v983 = vunpack.c.l.b16 %v947
        %v984 = vunpack.c.l.b16 %v948
        %v985 = vunpack.c.l.b16 %v949
        %v986 = vunpack.c.l.b16 %v950
        %v987 = vunpack.c.l.b16 %v951
        %v988 = vunpack.c.l.b16 %v952
        %v989 = vunpack.c.l.b16 %v953
        %v990 = vpack.c.b16 %v975, %v974
        %v991 = vpack.c.b16 %v977, %v976
        %v992 = vpack.c.b16 %v979, %v978
        %v993 = vpack.c.b16 %v981, %v980
        %v994 = vpack.c.b16 %v983, %v982
        %v995 = vpack.c.b16 %v985, %v984
        %v996 = vpack.c.b16 %v987, %v986
        %v997 = vpack.c.b16 %v989, %v988
        %1006 = vmatpush.bf16.msra.mxu0 %v997
        %1007 = vmatpush.bf16.msra.mxu0 %v996
        %1008 = vmatpush.bf16.msra.mxu0 %v995
        %1009 = vmatpush.bf16.msra.mxu0 %v994
        %1010 = vmatpush.bf16.msra.mxu0 %v993
        %1011 = vmatpush.bf16.msra.mxu0 %v992
        %1012 = vmatpush.bf16.msra.mxu0 %v991
        %1013 = vmatpush.bf16.msra.mxu0 %v990
        %1014 = vmatmul.bf16.gmra.mxu0 %v937
        %v1015 = vpop.f32.mrf.mxu0
        %v1016 = vadd.f32 %v956, %v1015
        %v1017 = vpop.f32.mrf.mxu0
        %1018 = vdwg.mxu0
        %1019 = vst [vmem:[%s519] sm:$0xff] %v1016
        %1020 = vst [vmem:[%s526] sm:$0xff] %v914
        %s1021 = sand.u32 %s242, 1
        %s1022 = scalar_lea.sflag [#allocation4], %s1021
        %s1023 = sand.u32 %s242, 1
        %s1024 = smul.addr %s1023, 8
        %s1025 = scalar_lea.vmem [#allocation14], %s1024
        %s1026 = sand.u32 %s270, 1
        %s1027 = scalar_lea.sflag [#allocation16], %s1026
        %s1028 = sand.u32 %s270, 1
        %s1029 = smul.addr %s1028, 8
        %s1030 = scalar_lea.vmem [#allocation15], %s1029
        // Predicated region
        $region81: #{tpu_custom_call.1} parent=51 // pred_check
          %p1031 = pneg %p252
        $region82: #{tpu_custom_call.1} parent=51 // pred_check_branch
          %1033 = sbr.rel (%p1031) target = $region84
        $region83: #{tpu_custom_call.1} parent=51 // pred_region
          %1035 = vsyncadd %s1022, 0
          %s1036 = sadd.s32 %s40, %s39
          %s1037 = smul.addr %s1036, 8
          %s1038 = scalar_lea.hbm %s8, %s1037
          %s1040 = sshll.u32 %s1025, 4
          %s1041 = int_to_ptr.vmem [resolvable:$true] %s1040
          %s1042 = sshll.u32 %s1038, 4
          %s1043 = int_to_ptr.hbm [resolvable:$true] %s1042
          %1045 = dma.vmem_to_hbm [thread:$0]  %s1041, 128, %s1043, %s1022
        $region84: #{tpu_custom_call.1} parent=51 // pred_fallthru
          _
        // Predicated region
        $region85: #{tpu_custom_call.1} parent=51 // pred_check
          %p1046 = pneg %p280
        $region86: #{tpu_custom_call.1} parent=51 // pred_check_branch
          %1048 = sbr.rel (%p1046) target = $region88
        $region87: #{tpu_custom_call.1} parent=51 // pred_region
          %1050 = vsyncadd %s1027, 0
          %s1051 = sadd.s32 %s40, %s39
          %s1052 = smul.addr %s1051, 8
          %s1053 = scalar_lea.hbm %s9, %s1052
          %s1055 = sshll.u32 %s1030, 4
          %s1056 = int_to_ptr.vmem [resolvable:$true] %s1055
          %s1057 = sshll.u32 %s1053, 4
          %s1058 = int_to_ptr.hbm [resolvable:$true] %s1057
          %1060 = dma.vmem_to_hbm [thread:$0]  %s1056, 128, %s1058, %s1027
        $region88: #{tpu_custom_call.1} parent=51 // pred_fallthru
          _
      $region52: #{tpu_custom_call.1} parent=5 // pred_fallthru
        _
      %p1061 = scmp.le.s32.totalorder 2, %s30
      // Predicated region
      $region89: #{tpu_custom_call.1} parent=5 // pred_check
        %p1062 = pneg %p1061
      $region90: #{tpu_custom_call.1} parent=5 // pred_check_branch
        %1064 = sbr.rel (%p1062) target = $region92
      $region91: #{tpu_custom_call.1} parent=5 // pred_region
        %s1065 = ssub.s32 %s30, 2
        // Predicated region
        $region93: #{tpu_custom_call.1} parent=91 // pred_check
          %p1066 = pneg %p258
        $region94: #{tpu_custom_call.1} parent=91 // pred_check_branch
          %1068 = sbr.rel (%p1066) target = $region96
        $region95: #{tpu_custom_call.1} parent=91 // pred_region
          %s1069 = sand.u32 %s243, 1
          %s1070 = scalar_lea.sflag [#allocation4], %s1069
          %s1071 = sand.u32 %s243, 1
          %s1072 = smul.addr %s1071, 8
          %s1073 = scalar_lea.vmem [#allocation14], %s1072
          %1075 = dma.done %s1070, 128
        $region96: #{tpu_custom_call.1} parent=91 // pred_fallthru
          _
        // Predicated region
        $region97: #{tpu_custom_call.1} parent=91 // pred_check
          %p1076 = pneg %p286
        $region98: #{tpu_custom_call.1} parent=91 // pred_check_branch
          %1078 = sbr.rel (%p1076) target = $region100
        $region99: #{tpu_custom_call.1} parent=91 // pred_region
          %s1079 = sand.u32 %s271, 1
          %s1080 = scalar_lea.sflag [#allocation16], %s1079
          %s1081 = sand.u32 %s271, 1
          %s1082 = smul.addr %s1081, 8
          %s1083 = scalar_lea.vmem [#allocation15], %s1082
          %1085 = dma.done %s1080, 128
        $region100: #{tpu_custom_call.1} parent=91 // pred_fallthru
          _
      $region92: #{tpu_custom_call.1} parent=5 // pred_fallthru
        _
    $region6: #{tpu_custom_call.1} parent=1 // loop_footer
      %s34 = sadd.s32 1, %s30
    $region7: #{tpu_custom_call.1} parent=1 // loop_footer_branch
      %29 = sbr.rel target = $region3
    $region8: #{tpu_custom_call.1} parent=1 // loop_exit
      _
    %1086 = vsyncpa [#allocation3], 1
    %s1087 = scalar_lea.sflag [#allocation3], 1
    %1088 = vsyncpa %s1087, 1
    %1089 = vsyncpa [#allocation6], 1
    %s1090 = scalar_lea.sflag [#allocation6], 1
    %1091 = vsyncpa %s1090, 1
    %1092 = vsyncpa [#allocation9], 1
    %1093 = vsyncpa [#allocation12], 1
    %1094 = vsyncpa [#allocation4], 1
    %s1095 = scalar_lea.sflag [#allocation4], 1
    %1096 = vsyncpa %s1095, 1
    %1097 = vsyncpa [#allocation16], 1
    %s1098 = scalar_lea.sflag [#allocation16], 1
    %1099 = vsyncpa %s1098, 1

</llo_original>
